<compile_context>
chip_gen: v6e
topology: v6e:2x2x1
jax: 0.10.0
libtpu: 0.0.40
codegen_flags: <defaults>
</compile_context>

<pallas_src>
import functools
import math

import jax
import jax.numpy as jnp
from jax import lax
from jax.experimental import pallas as pl
from jax.experimental.pallas import tpu as pltpu

COSM = math.cos(0.25)
SINM = math.sin(0.25)


def _mnce_kernel(q_ref, k_ref, loss_ref, *, inv_T, nce_T):
    """One grid step == one similarity group of n rows.

    q_ref, k_ref : (n, d) rows of feat_q / feat_k for this group.
    loss_ref     : (1, 1, n) lane-dense per-row cross-entropy losses.
    """
    q = q_ref[...]                                                      # (n, d)
    k = k_ref[...]                                                      # (n, d)
    n = q.shape[0]

    # Fold 1/T into the small (n, d) operand instead of scaling (n, n) logits.
    qs = q * inv_T

    # Transposed similarity matrix so per-row quantities live on the lane axis:
    # lt[j, i] = <k_j, q_i> / T.  Contract last dims of both operands (no
    # explicit transpose materialized); MXU accumulates in f32.
    lt = lax.dot_general(
        k, qs, (((1,), (1,)), ((), ())), preferred_element_type=jnp.float32
    )                                                                   # (n, n)

    rows = lax.broadcasted_iota(jnp.int32, (n, n), 0)
    cols = lax.broadcasted_iota(jnp.int32, (n, n), 1)
    eq = rows == cols

    # Positive logit <q_i, k_i> from the diagonal (column-sum keeps it lane
    # oriented), then arc-margin: cos(x + m) = cos x cos m - sin x sin m.
    cosx = jnp.sum(jnp.where(eq, lt, 0.0), axis=0, keepdims=True) * nce_T  # (1, n)
    sinx = jnp.sqrt(jnp.maximum(1.0 - cosx * cosx, 0.0))                   # NaN guard
    pos = (cosx * COSM - sinx * SINM) * inv_T                              # (1, n)

    # Negatives: self pair filled with -10/T, as in masked_fill_(-10) then /T.
    neg = jnp.where(eq, -10.0 * inv_T, lt)                                 # (n, n)

    # CrossEntropy(out, target=0) per row with out_i = [pos_i, neg[:, i]]:
    #   loss_i = logsumexp([pos_i, neg[:, i]]) - pos_i    (stable form).
    # All reductions are over the sublane axis -> results stay (1, n).
    m = jnp.maximum(jnp.max(neg, axis=0, keepdims=True), pos)              # (1, n)
    sumexp = jnp.sum(jnp.exp(neg - m), axis=0, keepdims=True) + jnp.exp(pos - m)
    lse = m + jnp.log(sumexp)                                              # (1, n)

    loss_ref[...] = (lse - pos).reshape(1, 1, n)


def marginal_nce_loss(feat_q, feat_k, nce_T=0.07):
    """Pallas implementation of MarginalNCE.forward (returns scalar loss)."""
    batch, dim = feat_q.shape
    g = max(1, batch // 64)
    n = batch // g
    assert g * n == batch, "batch must be divisible by max(1, batch // 64)"
    # (8,128) block rule: sublane block dim must be a multiple of 8 unless the
    # block covers the full array.  True for the standard n=64 grouping.
    assert n % 8 == 0 or g == 1, "group size must be a multiple of 8"

    kernel = functools.partial(
        _mnce_kernel, inv_T=float(1.0 / nce_T), nce_T=float(nce_T)
    )

    per_row = pl.pallas_call(
        kernel,
        out_shape=jax.ShapeDtypeStruct((g, 1, n), jnp.float32),
        grid_spec=pltpu.PrefetchScalarGridSpec(
            num_scalar_prefetch=0,
            grid=(g,),
            in_specs=[
                pl.BlockSpec((n, dim), lambda i: (i, 0)),
                pl.BlockSpec((n, dim), lambda i: (i, 0)),
            ],
            out_specs=pl.BlockSpec((1, 1, n), lambda i: (i, 0, 0)),
        ),
        compiler_params=pltpu.CompilerParams(
            # Distinct output blocks per step -> shard across TCs on v7x.
            dimension_semantics=("parallel",),
        ),
    )(feat_q, feat_k)

    # Mean reduction in the wrapper: keeps the grid free of cross-step
    # dependences (no resident accumulator, no serial read-modify-write).
    return jnp.mean(per_row)


def _reference_loss(feat_q, feat_k, nce_T=0.07):
    """Pure-JAX reference mirroring the PyTorch module."""
    batch, dim = feat_q.shape
    l_pos = jnp.sum(feat_q * feat_k, axis=1, keepdims=True)            # (B, 1)
    cosx = l_pos
    sinx = jnp.sqrt(1.0 - cosx ** 2)
    l_pos = cosx * COSM - sinx * SINM

    g = max(1, batch // 64)
    n = batch // g
    qg = feat_q.reshape(g, n, dim)
    kg = feat_k.reshape(g, n, dim)
    l_neg = jnp.einsum(
        "gnd,gmd->gnm", qg, kg, precision=jax.lax.Precision.HIGHEST
    )
    eye = jnp.eye(n, dtype=bool)[None]
    l_neg = jnp.where(eye, -10.0, l_neg).reshape(-1, n)

    out = jnp.concatenate([l_pos, l_neg], axis=1) / nce_T
    logz = jax.scipy.special.logsumexp(out, axis=1)
    loss = -out[:, 0] + logz
    return jnp.mean(loss)


if __name__ == "__main__":
    key = jax.random.PRNGKey(0)
    kq, kk = jax.random.split(key)

    # batch=128 exercises the grouped path (G=2 groups of 64 patches, one per
    # grid step); dim=32.  Features are L2-normalized so the arc-margin
    # sqrt(1 - cos^2) stays real, as in typical NCE usage.
    batch, dim = 128, 32
    feat_q = jax.random.normal(kq, (batch, dim), dtype=jnp.float32)
    feat_k = jax.random.normal(kk, (batch, dim), dtype=jnp.float32)
    feat_q = feat_q / jnp.linalg.norm(feat_q, axis=1, keepdims=True)
    feat_k = feat_k / jnp.linalg.norm(feat_k, axis=1, keepdims=True)

    loss = marginal_nce_loss(feat_q, feat_k, nce_T=0.07)
    loss = jax.block_until_ready(loss)

    ref = _reference_loss(feat_q, feat_k, nce_T=0.07)
    assert jnp.allclose(loss, ref, rtol=1e-4, atol=1e-4), (loss, ref)

    print("KERNEL_OK")
</pallas_src>

<mosaic_0001>
module attributes {stable_mosaic.version = 11 : i64} {
  func.func @_mnce_kernel(%arg0: i32, %arg1: memref<64x32xf32, #tpu.memory_space<vmem>>, %arg2: memref<64x32xf32, #tpu.memory_space<vmem>>, %arg3: memref<1x1x64xf32, #tpu.memory_space<vmem>>) attributes {dimension_semantics = [#tpu.dimension_semantics<parallel>], iteration_bounds = array<i64: 2>, scalar_prefetch = 0 : i64, scratch_operands = 0 : i64, tpu.core_type = #tpu.core_type<tc>, window_params = [{transform_indices = @transform_0, window_bounds = array<i64: 64, 32>}, {transform_indices = @transform_1, window_bounds = array<i64: 64, 32>}, {transform_indices = @transform_2, window_bounds = array<i64: 1, 1, 64>}]} {
    %c0 = arith.constant 0 : index
    %c0_0 = arith.constant 0 : index
    %0 = vector.load %arg1[%c0, %c0_0] : memref<64x32xf32, #tpu.memory_space<vmem>>, vector<64x32xf32>
    %c0_1 = arith.constant 0 : index
    %c0_2 = arith.constant 0 : index
    %1 = vector.load %arg2[%c0_1, %c0_2] : memref<64x32xf32, #tpu.memory_space<vmem>>, vector<64x32xf32>
    %cst = arith.constant 14.2857141 : f32
    %2 = vector.broadcast %cst : f32 to vector<64x32xf32>
    %3 = arith.mulf %0, %2 : vector<64x32xf32>
    %cst_3 = arith.constant dense<0.000000e+00> : vector<64x64xf32>
    %4 = tpu.matmul %1, %3, %cst_3 {dimension_numbers = #tpu.dot_dimension_numbers<[1], [1], [0], [0], [0, 0, 1, 0], [], []>} : vector<64x32xf32>, vector<64x32xf32>, vector<64x64xf32> -> vector<64x64xf32>
    %5 = tpu.iota {dimensions = array<i32: 0>} : vector<64x64xi32>
    %6 = tpu.iota {dimensions = array<i32: 1>} : vector<64x64xi32>
    %7 = arith.cmpi eq, %5, %6 : vector<64x64xi32>
    %cst_4 = arith.constant 0.000000e+00 : f32
    %8 = vector.broadcast %cst_4 : f32 to vector<64x64xf32>
    %9 = arith.select %7, %4, %8 : vector<64x64xi1>, vector<64x64xf32>
    %cst_5 = arith.constant dense<0.000000e+00> : vector<64xf32>
    %10 = vector.multi_reduction <add>, %9, %cst_5 [0] : vector<64x64xf32> to vector<64xf32>
    %11 = vector.shape_cast %10 : vector<64xf32> to vector<1x64xf32>
    %cst_6 = arith.constant 7.000000e-02 : f32
    %12 = vector.broadcast %cst_6 : f32 to vector<1x64xf32>
    %13 = arith.mulf %11, %12 : vector<1x64xf32>
    %14 = arith.mulf %13, %13 : vector<1x64xf32>
    %cst_7 = arith.constant 1.000000e+00 : f32
    %15 = vector.broadcast %cst_7 : f32 to vector<1x64xf32>
    %16 = arith.subf %15, %14 : vector<1x64xf32>
    %cst_8 = arith.constant 0.000000e+00 : f32
    %17 = vector.broadcast %cst_8 : f32 to vector<1x64xf32>
    %18 = arith.maximumf %16, %17 : vector<1x64xf32>
    %19 = math.sqrt %18 : vector<1x64xf32>
    %cst_9 = arith.constant 0.968912422 : f32
    %20 = vector.broadcast %cst_9 : f32 to vector<1x64xf32>
    %21 = arith.mulf %13, %20 : vector<1x64xf32>
    %cst_10 = arith.constant 0.247403964 : f32
    %22 = vector.broadcast %cst_10 : f32 to vector<1x64xf32>
    %23 = arith.mulf %19, %22 : vector<1x64xf32>
    %24 = arith.subf %21, %23 : vector<1x64xf32>
    %cst_11 = arith.constant 14.2857141 : f32
    %25 = vector.broadcast %cst_11 : f32 to vector<1x64xf32>
    %26 = arith.mulf %24, %25 : vector<1x64xf32>
    %cst_12 = arith.constant -142.857147 : f32
    %27 = vector.broadcast %cst_12 : f32 to vector<64x64xf32>
    %28 = arith.select %7, %27, %4 : vector<64x64xi1>, vector<64x64xf32>
    %cst_13 = arith.constant dense<0xFF800000> : vector<64xf32>
    %29 = vector.multi_reduction <maximumf>, %28, %cst_13 [0] : vector<64x64xf32> to vector<64xf32>
    %30 = vector.shape_cast %29 : vector<64xf32> to vector<1x64xf32>
    %31 = arith.maximumf %30, %26 : vector<1x64xf32>
    %32 = vector.broadcast %31 : vector<1x64xf32> to vector<64x64xf32>
    %33 = arith.subf %28, %32 : vector<64x64xf32>
    %34 = math.exp %33 : vector<64x64xf32>
    %cst_14 = arith.constant dense<0.000000e+00> : vector<64xf32>
    %35 = vector.multi_reduction <add>, %34, %cst_14 [0] : vector<64x64xf32> to vector<64xf32>
    %36 = vector.shape_cast %35 : vector<64xf32> to vector<1x64xf32>
    %37 = arith.subf %26, %31 : vector<1x64xf32>
    %38 = math.exp %37 : vector<1x64xf32>
    %39 = arith.addf %36, %38 : vector<1x64xf32>
    %40 = math.log %39 : vector<1x64xf32>
    %41 = arith.addf %31, %40 : vector<1x64xf32>
    %42 = arith.subf %41, %26 : vector<1x64xf32>
    %43 = vector.shape_cast %42 : vector<1x64xf32> to vector<1x1x64xf32>
    %c0_15 = arith.constant 0 : index
    %c0_16 = arith.constant 0 : index
    %c0_17 = arith.constant 0 : index
    %44 = vector.load %arg3[%c0_15, %c0_16, %c0_17] : memref<1x1x64xf32, #tpu.memory_space<vmem>>, vector<1x1x64xf32>
    tpu.vector_store %arg3[%c0_15, %c0_16, %c0_17], %43 {strides = array<i32>} : memref<1x1x64xf32, #tpu.memory_space<vmem>>, vector<1x1x64xf32>,
    return
  }
  func.func @transform_0(%arg0: i32) -> (i32, i32) {
    %c0_i32 = arith.constant 0 : i32
    %c0_i32_0 = arith.constant 0 : i32
    return %arg0, %c0_i32 : i32, i32
  }
  func.func @transform_1(%arg0: i32) -> (i32, i32) {
    %c0_i32 = arith.constant 0 : i32
    %c0_i32_0 = arith.constant 0 : i32
    return %arg0, %c0_i32 : i32, i32
  }
  func.func @transform_2(%arg0: i32) -> (i32, i32, i32) {
    %c0_i32 = arith.constant 0 : i32
    %c0_i32_0 = arith.constant 0 : i32
    %c0_i32_1 = arith.constant 0 : i32
    return %arg0, %c0_i32, %c0_i32_0 : i32, i32, i32
  }
}

</mosaic_0001>

<llo_original>
// kernel: tpu_custom_call.1
$region0: #{tpu_custom_call.1}
  #allocation0 [shape = 'u32[]', space=smem, size = 0x4, offset = 0x4, fixed_abs, tag = 'smem constant byte address 0x4 - core index']
  #allocation1 [shape = 'u32[144,128]{1,0:T(1,128)}', space=vmem, size = 0x12000, scoped, tag = 'internal scratch']
  %s0 = inlined_call_operand.vmem [shape: f32[128,32], index: 0, kind: input, shape index: {}]
  %s1 = inlined_call_operand.vmem [shape: f32[128,32], index: 1, kind: input, shape index: {}]
  %s2 = inlined_call_operand.hbm [shape: f32[2,1,64], index: 2, kind: output, shape index: {}]
  %s3 = sld [smem:[#allocation0]]
  $region41: #{tpu_custom_call.1} parent=0
    _
  %s5 = ssub.s32 1, %s3
  %s6 = scalar_select 0, %s5, %s3
  $region1: #{tpu_custom_call.1} parent=0
    #allocation2 [shape = 'u8[1024]{0}', space=vmem, size = 0x400, scoped, tag = 'output window, operand 0']
    #allocation3 [shape = 's32[2]{0}', space=sflag, size = 0x8, scoped, tag = 'scoped memory for tpu_custom_call.1']
    %7 = vsyncpa [#allocation3], 0
    %s8 = scalar_lea.sflag [#allocation3], 1
    %9 = vsyncpa %s8, 0
    loop: start=0, step=1, limit=4
    $region2: #{tpu_custom_call.1} parent=1 // loop_pre_header
      _
    $region3: #{tpu_custom_call.1} parent=1 // loop_header
      %s11 = sphi 0, %s15
      %p12 = scmp.ge.s32.totalorder %s11, 4
      %s21 = sphi 0, %s23
      %s24 = sphi 0, %s21
      %s25 = sphi 0, %s24
      %s41 = sphi 0, %s25
      %s47 = sphi 0, %s49
      %s50 = sphi 0, %s47
      %s51 = sphi 0, %s50
      %s67 = sphi 0, %s51
      %s73 = sphi 0, %s75
      %s76 = sphi 0, %s73
      %s77 = sphi 0, %s76
      %s93 = sphi 0, %s77
    $region4: #{tpu_custom_call.1} parent=1 // loop_header_branch
      %14 = sbr.rel (%p12) target = $region8
    $region5: #{tpu_custom_call.1} parent=1 // loop_body
      %s16 = ssub.s32 %s11, 1
      %s17 = ssub.s32 %s11, 2
      %s18 = sadd.s32 %s11, 1
      %s19 = ssub.s32 %s11, %s18
      %p20 = scmp.eq.s32.totalorder %s19, 0
      %s22 = sadd.s32 %s21, 1
      %s23 = scalar_select %p20, %s21, %s22
      %p26 = pneg %p20
      %p27 = scmp.eq.s32.totalorder %s11, 1
      %p28 = por %p26, %p27
      %p29 = scmp.ne.s32.totalorder %s21, %s24
      %p30 = scmp.eq.s32.totalorder %s11, 0
      %p31 = por %p29, %p30
      %p32 = scmp.ne.s32.totalorder %s21, %s24
      %p33 = scmp.eq.s32.totalorder %s16, 1
      %p34 = por %p32, %p33
      %p35 = scmp.ne.s32.totalorder %s24, %s25
      %p36 = scmp.eq.s32.totalorder %s16, 0
      %p37 = por %p35, %p36
      %p38 = scmp.ne.s32.totalorder %s24, %s25
      %p39 = scmp.eq.s32.totalorder %s17, 1
      %p40 = por %p38, %p39
      %p42 = scmp.ne.s32.totalorder %s25, %s41
      %p43 = scmp.eq.s32.totalorder %s17, 0
      %p44 = por %p42, %p43
      %s45 = ssub.s32 %s11, %s18
      %p46 = scmp.eq.s32.totalorder %s45, 0
      %s48 = sadd.s32 %s47, 1
      %s49 = scalar_select %p46, %s47, %s48
      %p52 = pneg %p46
      %p53 = scmp.eq.s32.totalorder %s11, 1
      %p54 = por %p52, %p53
      %p55 = scmp.ne.s32.totalorder %s47, %s50
      %p56 = scmp.eq.s32.totalorder %s11, 0
      %p57 = por %p55, %p56
      %p58 = scmp.ne.s32.totalorder %s47, %s50
      %p59 = scmp.eq.s32.totalorder %s16, 1
      %p60 = por %p58, %p59
      %p61 = scmp.ne.s32.totalorder %s50, %s51
      %p62 = scmp.eq.s32.totalorder %s16, 0
      %p63 = por %p61, %p62
      %p64 = scmp.ne.s32.totalorder %s50, %s51
      %p65 = scmp.eq.s32.totalorder %s17, 1
      %p66 = por %p64, %p65
      %p68 = scmp.ne.s32.totalorder %s51, %s67
      %p69 = scmp.eq.s32.totalorder %s17, 0
      %p70 = por %p68, %p69
      %s71 = ssub.s32 %s11, %s18
      %p72 = scmp.eq.s32.totalorder %s71, 0
      %s74 = sadd.s32 %s73, 1
      %s75 = scalar_select %p72, %s73, %s74
      %p78 = pneg %p72
      %p79 = scmp.eq.s32.totalorder %s11, 1
      %p80 = por %p78, %p79
      %p81 = scmp.ne.s32.totalorder %s73, %s76
      %p82 = scmp.eq.s32.totalorder %s11, 0
      %p83 = por %p81, %p82
      %p84 = scmp.ne.s32.totalorder %s73, %s76
      %p85 = scmp.eq.s32.totalorder %s16, 1
      %p86 = por %p84, %p85
      %p87 = scmp.ne.s32.totalorder %s76, %s77
      %p88 = scmp.eq.s32.totalorder %s16, 0
      %p89 = por %p87, %p88
      %p90 = scmp.ne.s32.totalorder %s76, %s77
      %p91 = scmp.eq.s32.totalorder %s17, 1
      %p92 = por %p90, %p91
      %p94 = scmp.ne.s32.totalorder %s77, %s93
      %p95 = scmp.eq.s32.totalorder %s17, 0
      %p96 = por %p94, %p95
      %p97 = scmp.le.s32.totalorder 1, %s11
      %p98 = scmp.lt.s32.totalorder %s11, 3
      %p99 = pnand %p97, %p98
      %p100 = pneg %p99
      // Predicated region
      $region9: #{tpu_custom_call.1} parent=5 // pred_check
        _
      $region10: #{tpu_custom_call.1} parent=5 // pred_check_branch
        %102 = sbr.rel (%p99) target = $region12
      $region11: #{tpu_custom_call.1} parent=5 // pred_region
        %s103 = ssub.s32 %s11, 1
      $region12: #{tpu_custom_call.1} parent=5 // pred_fallthru
        _
      %p104 = scmp.lt.s32.totalorder %s11, 2
      // Predicated region
      $region13: #{tpu_custom_call.1} parent=5 // pred_check
        %p105 = pneg %p104
      $region14: #{tpu_custom_call.1} parent=5 // pred_check_branch
        %107 = sbr.rel (%p105) target = $region16
      $region15: #{tpu_custom_call.1} parent=5 // pred_region
        // Predicated region
        $region17: #{tpu_custom_call.1} parent=15 // pred_check
          %p108 = pneg %p31
        $region18: #{tpu_custom_call.1} parent=15 // pred_check_branch
          %110 = sbr.rel (%p108) target = $region20
        $region19: #{tpu_custom_call.1} parent=15 // pred_region
          %s111 = smul.u32 8, %s11
          %p112 = scmp.lt.s32.totalorder %s111, 15
          %s113 = scalar_select %p112, %s111, 15
          %s114 = smul.addr %s113, 8
          %s115 = scalar_lea.vmem %s0, %s114
          %s116 = smul.u32 8, %s11
        $region20: #{tpu_custom_call.1} parent=15 // pred_fallthru
          _
        // Predicated region
        $region21: #{tpu_custom_call.1} parent=15 // pred_check
          %p117 = pneg %p57
        $region22: #{tpu_custom_call.1} parent=15 // pred_check_branch
          %119 = sbr.rel (%p117) target = $region24
        $region23: #{tpu_custom_call.1} parent=15 // pred_region
          %s120 = smul.u32 8, %s11
          %p121 = scmp.lt.s32.totalorder %s120, 15
          %s122 = scalar_select %p121, %s120, 15
          %s123 = smul.addr %s122, 8
          %s124 = scalar_lea.vmem %s1, %s123
          %s125 = smul.u32 8, %s11
        $region24: #{tpu_custom_call.1} parent=15 // pred_fallthru
          _
      $region16: #{tpu_custom_call.1} parent=5 // pred_fallthru
        _
      %p126 = scmp.le.s32.totalorder 1, %s11
      %p127 = scmp.lt.s32.totalorder %s11, 3
      %p128 = pnand %p126, %p127
      %p129 = pneg %p128
      // Predicated region
      $region25: #{tpu_custom_call.1} parent=5 // pred_check
        _
      $region26: #{tpu_custom_call.1} parent=5 // pred_check_branch
        %131 = sbr.rel (%p128) target = $region28
      $region27: #{tpu_custom_call.1} parent=5 // pred_region
        %s132 = ssub.s32 %s11, 1
        %s133 = smul.u32 8, %s16
        %p134 = scmp.lt.s32.totalorder %s133, 15
        %s135 = scalar_select %p134, %s133, 15
        %s136 = smul.addr %s135, 8
        %s137 = scalar_lea.vmem %s0, %s136
        %p138 = pneg %p37
        %p139 = pneg %p34
        %s140 = smul.u32 8, %s16
        %p141 = scmp.lt.s32.totalorder %s140, 15
        %s142 = scalar_select %p141, %s140, 15
        %s143 = smul.addr %s142, 8
        %s144 = scalar_lea.vmem %s1, %s143
        %p145 = pneg %p63
        %p146 = pneg %p60
        %p147 = pneg %p89
        %p148 = pneg %p86
        %s149 = sand.u32 %s76, 1
        %s150 = scalar_lea.sflag [#allocation3], %s149
        %s151 = sand.u32 %s76, 1
        %s152 = scalar_lea.vmem [#allocation2], %s151
        %s153 = smul.u32 8, %s16
        %p154 = scmp.lt.s32.totalorder %s153, 15
        %s155 = scalar_select %p154, %s153, 15
        %s156 = smul.addr %s155, 8
        %s157 = scalar_lea.vmem %s0, %s156
        %s158 = smul.u32 8, %s16
        %s159 = smul.u32 8, %s16
        %p160 = scmp.lt.s32.totalorder %s159, 15
        %s161 = scalar_select %p160, %s159, 15
        %s162 = smul.addr %s161, 8
        %s163 = scalar_lea.vmem %s1, %s162
        %s164 = smul.u32 8, %s16
        %v165 = vld [vmem:[%s157] sm:$0xff]
        %v166 = vld [vmem:[%s157 + $0x8] sm:$0xff]
        %v167 = vld [vmem:[%s157 + $0x10] sm:$0xff]
        %v168 = vld [vmem:[%s157 + $0x18] sm:$0xff]
        %v169 = vld [vmem:[%s157 + $0x20] sm:$0xff]
        %v170 = vld [vmem:[%s157 + $0x28] sm:$0xff]
        %v171 = vld [vmem:[%s157 + $0x30] sm:$0xff]
        %v172 = vld [vmem:[%s157 + $0x38] sm:$0xff]
        %v173 = vld [vmem:[%s163] sm:$0xff]
        %v174 = vld [vmem:[%s163 + $0x8] sm:$0xff]
        %v175 = vld [vmem:[%s163 + $0x10] sm:$0xff]
        %v176 = vld [vmem:[%s163 + $0x18] sm:$0xff]
        %v177 = vld [vmem:[%s163 + $0x20] sm:$0xff]
        %v178 = vld [vmem:[%s163 + $0x28] sm:$0xff]
        %v179 = vld [vmem:[%s163 + $0x30] sm:$0xff]
        %v180 = vld [vmem:[%s163 + $0x38] sm:$0xff]
        %v181 = vmul.f32 %v165, 14.285714
        %v182 = vmul.f32 %v166, 14.285714
        %v183 = vmul.f32 %v167, 14.285714
        %v184 = vmul.f32 %v168, 14.285714
        %v185 = vmul.f32 %v169, 14.285714
        %v186 = vmul.f32 %v170, 14.285714
        %v187 = vmul.f32 %v171, 14.285714
        %v188 = vmul.f32 %v172, 14.285714
        %vm189 = vcmask 261120
        %v191 = vsel %vm189, %v173, 0
        %v194 = vsel %vm189, %v174, 0
        %v197 = vsel %vm189, %v175, 0
        %v200 = vsel %vm189, %v176, 0
        %v203 = vsel %vm189, %v177, 0
        %v206 = vsel %vm189, %v178, 0
        %v209 = vsel %vm189, %v179, 0
        %v212 = vsel %vm189, %v180, 0
        %v215 = vsel %vm189, %v181, 0
        %v218 = vsel %vm189, %v182, 0
        %v221 = vsel %vm189, %v183, 0
        %v224 = vsel %vm189, %v184, 0
        %v227 = vsel %vm189, %v185, 0
        %v230 = vsel %vm189, %v186, 0
        %v233 = vsel %vm189, %v187, 0
        %v236 = vsel %vm189, %v188, 0
        %238 = vmatprep.subr.mxu0 0.0
        %239 = vmatpush1.xpose.msra.mxu0 0.0
        %240 = vmatprep.subr.mxu0 0.0
        %241 = vmatpush1.xpose.msra.mxu0 0.0
        %242 = vmatprep.subr.mxu0 0.0
        %243 = vmatpush1.xpose.msra.mxu0 0.0
        %244 = vmatprep.subr.mxu0 0.0
        %245 = vmatpush1.xpose.msra.mxu0 0.0
        %246 = vmatprep.subr.mxu0 0.0
        %247 = vmatpush1.xpose.msra.mxu0 0.0
        %248 = vmatprep.subr.mxu0 0.0
        %249 = vmatpush1.xpose.msra.mxu0 0.0
        %250 = vmatprep.subr.mxu0 0.0
        %251 = vmatpush1.xpose.msra.mxu0 0.0
        %252 = vmatprep.subr.mxu0 0.0
        %253 = vmatpush1.xpose.msra.mxu0 0.0
        %254 = vmatprep.subr.mxu0 0.0
        %255 = vmatpush1.xpose.msra.mxu0 %v236
        %256 = vmatprep.subr.mxu0 0.0
        %257 = vmatpush1.xpose.msra.mxu0 %v233
        %258 = vmatprep.subr.mxu0 0.0
        %259 = vmatpush1.xpose.msra.mxu0 %v230
        %260 = vmatprep.subr.mxu0 0.0
        %261 = vmatpush1.xpose.msra.mxu0 %v227
        %262 = vmatprep.subr.mxu0 0.0
        %263 = vmatpush1.xpose.msra.mxu0 %v224
        %264 = vmatprep.subr.mxu0 0.0
        %265 = vmatpush1.xpose.msra.mxu0 %v221
        %266 = vmatprep.subr.mxu0 0.0
        %267 = vmatpush1.xpose.msra.mxu0 %v218
        %268 = vmatprep.subr.mxu0 0.0
        %269 = vmatpush1.xpose.msra.mxu0 %v215
        %270 = vmatprep.subr.mxu0 0.0
        %271 = vmatpush2.xpose.msra.mxu0 0.0
        %272 = vmatprep.subr.mxu0 0.0
        %273 = vmatpush2.xpose.msra.mxu0 0.0
        %274 = vmatprep.subr.mxu0 0.0
        %275 = vmatpush2.xpose.msra.mxu0 0.0
        %276 = vmatprep.subr.mxu0 0.0
        %277 = vmatpush2.xpose.msra.mxu0 0.0
        %278 = vmatprep.subr.mxu0 0.0
        %279 = vmatpush2.xpose.msra.mxu0 0.0
        %280 = vmatprep.subr.mxu0 0.0
        %281 = vmatpush2.xpose.msra.mxu0 0.0
        %282 = vmatprep.subr.mxu0 0.0
        %283 = vmatpush2.xpose.msra.mxu0 0.0
        %284 = vmatprep.subr.mxu0 0.0
        %285 = vmatpush2.xpose.msra.mxu0 0.0
        %286 = vmatprep.subr.mxu0 0.0
        %287 = vmatpush2.xpose.msra.mxu0 0.0
        %288 = vmatprep.subr.mxu0 0.0
        %289 = vmatpush2.xpose.msra.mxu0 0.0
        %290 = vmatprep.subr.mxu0 0.0
        %291 = vmatpush2.xpose.msra.mxu0 0.0
        %292 = vmatprep.subr.mxu0 0.0
        %293 = vmatpush2.xpose.msra.mxu0 0.0
        %294 = vmatprep.subr.mxu0 0.0
        %295 = vmatpush2.xpose.msra.mxu0 0.0
        %296 = vmatprep.subr.mxu0 0.0
        %297 = vmatpush2.xpose.msra.mxu0 0.0
        %298 = vmatprep.subr.mxu0 0.0
        %299 = vmatpush2.xpose.msra.mxu0 0.0
        %300 = vmatprep.subr.mxu0 0.0
        %301 = vmatpush2.xpose.msra.mxu0 0.0
        %302 = vmatprep.mubr.f32.mxu0 0.0
        %303 = vmatmul.mubr.f32.gmra.mxu0 %v191
        %v304 = vpop.f32.mrf.mxu0
        %v305 = vadd.f32 0.0, %v304
        %v306 = vpop.f32.mrf.mxu0
        %307 = vmatprep.mubr.f32.mxu0 0.0
        %308 = vmatmul.mubr.f32.gmra.mxu0 %v194
        %v309 = vpop.f32.mrf.mxu0
        %v310 = vadd.f32 0.0, %v309
        %v311 = vpop.f32.mrf.mxu0
        %312 = vmatprep.mubr.f32.mxu0 0.0
        %313 = vmatmul.mubr.f32.gmra.mxu0 %v197
        %v314 = vpop.f32.mrf.mxu0
        %v315 = vadd.f32 0.0, %v314
        %v316 = vpop.f32.mrf.mxu0
        %317 = vmatprep.mubr.f32.mxu0 0.0
        %318 = vmatmul.mubr.f32.gmra.mxu0 %v200
        %v319 = vpop.f32.mrf.mxu0
        %v320 = vadd.f32 0.0, %v319
        %v321 = vpop.f32.mrf.mxu0
        %322 = vmatprep.mubr.f32.mxu0 0.0
        %323 = vmatmul.mubr.f32.gmra.mxu0 %v203
        %v324 = vpop.f32.mrf.mxu0
        %v325 = vadd.f32 0.0, %v324
        %v326 = vpop.f32.mrf.mxu0
        %327 = vmatprep.mubr.f32.mxu0 0.0
        %328 = vmatmul.mubr.f32.gmra.mxu0 %v206
        %v329 = vpop.f32.mrf.mxu0
        %v330 = vadd.f32 0.0, %v329
        %v331 = vpop.f32.mrf.mxu0
        %332 = vmatprep.mubr.f32.mxu0 0.0
        %333 = vmatmul.mubr.f32.gmra.mxu0 %v209
        %v334 = vpop.f32.mrf.mxu0
        %v335 = vadd.f32 0.0, %v334
        %v336 = vpop.f32.mrf.mxu0
        %337 = vmatprep.mubr.f32.mxu0 0.0
        %338 = vmatmul.mubr.f32.gmra.mxu0 %v212
        %v339 = vpop.f32.mrf.mxu0
        %v340 = vadd.f32 0.0, %v339
        %v341 = vpop.f32.mrf.mxu0
        %342 = vdwg.mxu0
        %v343 = vlaneseq
        %v344 = vshrl.u32 %v343, 7
        %v345 = vadd.s32 %v344, 8
        %v346 = vadd.s32 %v344, 16
        %v347 = vadd.s32 %v344, 24
        %v348 = vadd.s32 %v344, 32
        %v349 = vadd.s32 %v344, 40
        %v350 = vadd.s32 %v344, 48
        %v351 = vadd.s32 %v344, 56
        %v352 = vlaneseq
        %v353 = vand.u32 %v352, 127
        %vm354 = vcmp.eq.s32.totalorder %v344, %v353
        %vm355 = vcmp.eq.s32.totalorder %v345, %v353
        %vm356 = vcmp.eq.s32.totalorder %v346, %v353
        %vm357 = vcmp.eq.s32.totalorder %v347, %v353
        %vm358 = vcmp.eq.s32.totalorder %v348, %v353
        %vm359 = vcmp.eq.s32.totalorder %v349, %v353
        %vm360 = vcmp.eq.s32.totalorder %v350, %v353
        %vm361 = vcmp.eq.s32.totalorder %v351, %v353
        %v362 = vsel %vm354, %v305, 0.0
        %v363 = vsel %vm355, %v310, 0.0
        %v364 = vsel %vm356, %v315, 0.0
        %v365 = vsel %vm357, %v320, 0.0
        %v366 = vsel %vm358, %v325, 0.0
        %v367 = vsel %vm359, %v330, 0.0
        %v368 = vsel %vm360, %v335, 0.0
        %v369 = vsel %vm361, %v340, 0.0
        %vm370 = vcmask 523264
        %v371 = vsel %vm370, %v362, 0.0
        %v372 = vsel %vm370, %v363, 0.0
        %v373 = vadd.f32 %v371, %v372
        %v374 = vsel %vm370, %v364, 0.0
        %v375 = vadd.f32 %v373, %v374
        %v376 = vsel %vm370, %v365, 0.0
        %v377 = vadd.f32 %v375, %v376
        %v378 = vsel %vm370, %v366, 0.0
        %v379 = vadd.f32 %v377, %v378
        %v380 = vsel %vm370, %v367, 0.0
        %v381 = vadd.f32 %v379, %v380
        %v382 = vsel %vm370, %v368, 0.0
        %v383 = vadd.f32 %v381, %v382
        %v384 = vsel %vm370, %v369, 0.0
        %v385 = vadd.f32 %v383, %v384
        %v386 = vrot.slane %v385, 4
        %v387 = vadd.f32 %v385, %v386
        %v388 = vrot.slane %v387, 2
        %v389 = vadd.f32 %v387, %v388
        %v390 = vrot.slane %v389, 1
        %v391 = vadd.f32 %v389, %v390
        %v392 = vmul.f32 %v391, 0.07
        %v393 = vmul.f32 %v392, %v392
        %v394 = vsub.f32 1.0, %v393
        %v395 = vmax.f32 %v394, 0.0
        %v396 = vrsqrt.pop %v395
        %v397 = vmul.f32 %v395, %v396
        %vm398 = vcmp.eq.f32.partialorder %v395, inf
        %v399 = vsel %vm398, %v395, %v397
        %vm400 = vcmp.eq.f32.partialorder %v395, 0.0
        %v401 = vand.u32 %v395, 2147483648
        %v402 = vsel %vm400, %v401, %v399
        %v403 = vmul.f32 %v392, 0.9689124
        %v404 = vmul.f32 %v402, 0.24740396
        %v405 = vsub.f32 %v403, %v404
        %v406 = vmul.f32 %v405, 14.285714
        %v407 = vsel %vm354, -142.85715, %v305
        %v408 = vsel %vm355, -142.85715, %v310
        %v409 = vsel %vm356, -142.85715, %v315
        %v410 = vsel %vm357, -142.85715, %v320
        %v411 = vsel %vm358, -142.85715, %v325
        %v412 = vsel %vm359, -142.85715, %v330
        %v413 = vsel %vm360, -142.85715, %v335
        %v414 = vsel %vm361, -142.85715, %v340
        %v415 = vsel %vm370, %v407, -inf
        %v416 = vsel %vm370, %v408, -inf
        %v417 = vsel %vm370, %v409, -inf
        %v418 = vsel %vm370, %v410, -inf
        %v419 = vsel %vm370, %v411, -inf
        %v420 = vmax.f32 %v415, %v419
        %v421 = vsel %vm370, %v412, -inf
        %v422 = vmax.f32 %v416, %v421
        %v423 = vsel %vm370, %v413, -inf
        %v424 = vmax.f32 %v417, %v423
        %v425 = vsel %vm370, %v414, -inf
        %v426 = vmax.f32 %v418, %v425
        %v427 = vmax.f32 %v420, %v422
        %v428 = vmax.f32 %v424, %v426
        %v429 = vmax.f32 %v427, %v428
        %v430 = vrot.slane %v429, 4
        %v431 = vmax.f32 %v429, %v430
        %v432 = vrot.slane %v431, 2
        %v433 = vmax.f32 %v431, %v432
        %v434 = vrot.slane %v433, 1
        %v435 = vmax.f32 %v433, %v434
        %v436 = vmax.f32 %v435, %v406
        %v437 = vsub.f32 %v407, %v436
        %v438 = vsub.f32 %v408, %v436
        %v439 = vsub.f32 %v409, %v436
        %v440 = vsub.f32 %v410, %v436
        %v441 = vsub.f32 %v411, %v436
        %v442 = vsub.f32 %v412, %v436
        %v443 = vsub.f32 %v413, %v436
        %v444 = vsub.f32 %v414, %v436
        %v445 = vmul.f32 %v437, 1.442695
        %v446 = vpow.pop %v445
        %v447 = vmul.f32 %v438, 1.442695
        %v448 = vpow.pop %v447
        %v449 = vmul.f32 %v439, 1.442695
        %v450 = vpow.pop %v449
        %v451 = vmul.f32 %v440, 1.442695
        %v452 = vpow.pop %v451
        %v453 = vmul.f32 %v441, 1.442695
        %v454 = vpow.pop %v453
        %v455 = vmul.f32 %v442, 1.442695
        %v456 = vpow.pop %v455
        %v457 = vmul.f32 %v443, 1.442695
        %v458 = vpow.pop %v457
        %v459 = vmul.f32 %v444, 1.442695
        %v460 = vpow.pop %v459
        %v461 = vsel %vm370, %v446, 0.0
        %v462 = vsel %vm370, %v448, 0.0
        %v463 = vadd.f32 %v461, %v462
        %v464 = vsel %vm370, %v450, 0.0
        %v465 = vadd.f32 %v463, %v464
        %v466 = vsel %vm370, %v452, 0.0
        %v467 = vadd.f32 %v465, %v466
        %v468 = vsel %vm370, %v454, 0.0
        %v469 = vadd.f32 %v467, %v468
        %v470 = vsel %vm370, %v456, 0.0
        %v471 = vadd.f32 %v469, %v470
        %v472 = vsel %vm370, %v458, 0.0
        %v473 = vadd.f32 %v471, %v472
        %v474 = vsel %vm370, %v460, 0.0
        %v475 = vadd.f32 %v473, %v474
        %v476 = vrot.slane %v475, 4
        %v477 = vadd.f32 %v475, %v476
        %v478 = vrot.slane %v477, 2
        %v479 = vadd.f32 %v477, %v478
        %v480 = vrot.slane %v479, 1
        %v481 = vadd.f32 %v479, %v480
        %v482 = vsub.f32 %v406, %v436
        %v483 = vmul.f32 %v482, 1.442695
        %v484 = vpow.pop %v483
        %v485 = vadd.f32 %v481, %v484
        %v486 = vlog2.pop %v485
        %v487 = vmul.f32 %v486, 0.6931472
        %v488 = vadd.f32 %v436, %v487
        %v489 = vsub.f32 %v488, %v406
        %vm490 = vcmask 516096
        %491 = vst.msk [vmem:[%s152] sm:$0x1] %vm490, %v489
        %s492 = sand.u32 %s76, 1
        %s493 = scalar_lea.sflag [#allocation3], %s492
        %s494 = sand.u32 %s76, 1
        %s495 = scalar_lea.vmem [#allocation2], %s494
        // Predicated region
        $region29: #{tpu_custom_call.1} parent=27 // pred_check
          %p496 = pneg %p86
        $region30: #{tpu_custom_call.1} parent=27 // pred_check_branch
          %498 = sbr.rel (%p496) target = $region32
        $region31: #{tpu_custom_call.1} parent=27 // pred_region
          %s500 = ssub.s32 16, 16
          %501 = vsyncadd %s493, %s500
          %s502 = smul.addr %s16, 16
          %s503 = scalar_lea.hbm %s2, %s502
          %s505 = sshll.u32 %s495, 4
          %s506 = int_to_ptr.vmem [resolvable:$true] %s505
          %508 = dma.vmem_to_hbm [thread:$0]  %s506, 16, %s503, %s493
        $region32: #{tpu_custom_call.1} parent=27 // pred_fallthru
          _
      $region28: #{tpu_custom_call.1} parent=5 // pred_fallthru
        _
      %p509 = scmp.le.s32.totalorder 2, %s11
      // Predicated region
      $region33: #{tpu_custom_call.1} parent=5 // pred_check
        %p510 = pneg %p509
      $region34: #{tpu_custom_call.1} parent=5 // pred_check_branch
        %512 = sbr.rel (%p510) target = $region36
      $region35: #{tpu_custom_call.1} parent=5 // pred_region
        %s513 = ssub.s32 %s11, 2
        // Predicated region
        $region37: #{tpu_custom_call.1} parent=35 // pred_check
          %p514 = pneg %p92
        $region38: #{tpu_custom_call.1} parent=35 // pred_check_branch
          %516 = sbr.rel (%p514) target = $region40
        $region39: #{tpu_custom_call.1} parent=35 // pred_region
          %s517 = sand.u32 %s77, 1
          %s518 = scalar_lea.sflag [#allocation3], %s517
          %s519 = sand.u32 %s77, 1
          %s520 = scalar_lea.vmem [#allocation2], %s519
          %521 = dma.done %s518, 16
        $region40: #{tpu_custom_call.1} parent=35 // pred_fallthru
          _
      $region36: #{tpu_custom_call.1} parent=5 // pred_fallthru
        _
    $region6: #{tpu_custom_call.1} parent=1 // loop_footer
      %s15 = sadd.s32 1, %s11
    $region7: #{tpu_custom_call.1} parent=1 // loop_footer_branch
      %10 = sbr.rel target = $region3
    $region8: #{tpu_custom_call.1} parent=1 // loop_exit
      _
    %522 = vsyncpa [#allocation3], 1
    %s523 = scalar_lea.sflag [#allocation3], 1
    %524 = vsyncpa %s523, 1

</llo_original>
